<compile_context>
chip_gen: v7x
topology: tpu7x:2x2x1
jax: 0.10.0
libtpu: 0.0.40
codegen_flags: <defaults>
</compile_context>

<pallas_src>
import numpy as np
import jax
import jax.numpy as jnp
from jax import lax
from jax.experimental import pallas as pl
from jax.experimental.pallas import tpu as pltpu

EMB_WEIGHT_UNIFORM_INIT_BOUND = 0.000316


def _round_up(x: int, m: int) -> int:
    return (x + m - 1) // m * m


def _make_kernel(tables_per_block: int, batch_padded: int, emb_dim: int):
    TBLK, Bp, D = tables_per_block, batch_padded, emb_dim

    def kernel(idx_ref, starts_ref, ends_ref, w_ref, out_ref):
        # idx_ref:    (L_pad, 1) int32    all indices, padded with -1
        # starts_ref: (TBLK*Bp, 1) int32  bag start offsets for this table block
        # ends_ref:   (TBLK*Bp, 1) int32  bag end offsets (start==end for pad bags)
        # w_ref:      (TBLK, Ec, D) f32   one E-chunk of each table in the block
        # out_ref:    (Bp, TBLK*D) f32    pooled output slab (accumulated over chunks)
        c = pl.program_id(1)                      # E-chunk index (reduction axis)
        L_pad = idx_ref.shape[0]
        Ec = w_ref.shape[1]
        TBp = TBLK * Bp

        @pl.when(c == 0)
        def _init():
            out_ref[...] = jnp.zeros_like(out_ref)

        # P[r, j] = 1 iff index position j belongs to bag r of this table block.
        # Padded positions / other tables' positions fall outside every
        # [start, end) range -> exact 0.  bf16 is exact for {0, 1}.
        j_iota = lax.broadcasted_iota(jnp.int32, (TBp, L_pad), 1)
        p_mask = jnp.logical_and(j_iota >= starts_ref[...], j_iota < ends_ref[...])
        P = jnp.where(p_mask, 1.0, 0.0).astype(jnp.bfloat16)          # (TBp, L_pad)

        # Q[j, e] = 1 iff indices[j] == c*Ec + e (chunk-local multi-hot selector).
        e_iota = lax.broadcasted_iota(jnp.int32, (L_pad, Ec), 1)
        q_mask = (idx_ref[...] - c * Ec) == e_iota
        Q = jnp.where(q_mask, 1.0, 0.0).astype(jnp.bfloat16)          # (L_pad, Ec)

        # counts[r, e] = multiplicity of chunk row e in bag r (bf16 MXU, f32 acc).
        counts = jnp.dot(P, Q, preferred_element_type=jnp.float32)    # (TBp, Ec)

        # Per-table weight matmul stays f32-accumulated f32; accumulate each
        # E-chunk straight into the final lane-dense (Bp, T*D) layout.
        for t in range(TBLK):                                         # static unroll
            out_ref[:, t * D:(t + 1) * D] += jnp.dot(
                counts[t * Bp:(t + 1) * Bp, :], w_ref[t],
                preferred_element_type=jnp.float32)

    return kernel


def sparse_arch_forward(indices, offsets, weights, *, tables_per_block=None,
                        max_e_chunk=512):
    """TBE SUM-pooling forward.

    indices: (L,) int       concatenated bag indices over all (table, batch) pairs
    offsets: (T*B+1,) int   TBE offsets
    weights: (T, E, D) f32  embedding tables
    returns: (B, T*D) f32   (tables concatenated along dim 1)
    """
    T, E, D = weights.shape
    B = (offsets.shape[0] - 1) // T
    L = indices.shape[0]                      # static shape; never reads offsets[-1]

    # MXU-friendly padding: contraction dim (L) to 128 lanes, M dim (bags) to 8.
    L_pad = _round_up(max(L, 1), 128)
    Bp = _round_up(B, 8)

    TBLK = T if tables_per_block is None else tables_per_block
    assert T % TBLK == 0
    # E-chunking bounds VMEM/step: ~2*TBLK*Ec*D*4 (double-buffered weights)
    # + L_pad*Ec*2 (Q) + TBp*Ec*4 (counts)  -- stays well under the 32 MiB
    # scoped default on v6e/v7x for Ec<=512 at typical D.
    Ec = max_e_chunk if (E > max_e_chunk and E % max_e_chunk == 0) else E
    n_chunks = E // Ec

    idx_col = jnp.pad(indices.astype(jnp.int32), (0, L_pad - L),
                      constant_values=-1).reshape(L_pad, 1)

    off = offsets.astype(jnp.int32)
    starts = jnp.zeros((T, Bp), jnp.int32).at[:, :B].set(off[:-1].reshape(T, B))
    ends = jnp.zeros((T, Bp), jnp.int32).at[:, :B].set(off[1:].reshape(T, B))
    starts = starts.reshape(T // TBLK, TBLK * Bp, 1)
    ends = ends.reshape(T // TBLK, TBLK * Bp, 1)

    cost = pl.CostEstimate(
        flops=2 * T * Bp * L_pad * E + 2 * T * Bp * E * D,
        transcendentals=0,
        bytes_accessed=4 * (T * E * D + L_pad + 2 * T * Bp + Bp * T * D))

    out = pl.pallas_call(
        _make_kernel(TBLK, Bp, D),
        out_shape=jax.ShapeDtypeStruct((Bp, T * D), jnp.float32),
        grid_spec=pltpu.PrefetchScalarGridSpec(
            num_scalar_prefetch=0,
            grid=(T // TBLK, n_chunks),                 # reduction (E-chunk) axis last
            in_specs=[
                pl.BlockSpec((L_pad, 1), lambda g, c: (0, 0)),               # indices
                pl.BlockSpec((None, TBLK * Bp, 1), lambda g, c: (g, 0, 0)),  # bag starts
                pl.BlockSpec((None, TBLK * Bp, 1), lambda g, c: (g, 0, 0)),  # bag ends
                pl.BlockSpec((TBLK, Ec, D), lambda g, c: (g, c, 0)),         # weights
            ],
            out_specs=pl.BlockSpec((Bp, TBLK * D), lambda g, c: (0, g)),     # lane-dense
        ),
        compiler_params=pltpu.CompilerParams(
            dimension_semantics=("parallel", "arbitrary")),  # tables parallel (v7x 2 TCs)
        cost_estimate=cost,
    )(idx_col, starts, ends, weights)

    return out[:B]


def _reference(indices, offsets, weights, B):
    idx = np.asarray(indices)
    off = np.asarray(offsets)
    w = np.asarray(weights)
    T, E, D = w.shape
    out = np.zeros((B, T * D), np.float32)
    for t in range(T):
        for b in range(B):
            s, e = off[t * B + b], off[t * B + b + 1]
            if e > s:
                out[b, t * D:(t + 1) * D] = w[t, idx[s:e]].sum(axis=0)
    return out


if __name__ == "__main__":
    # Small deterministic problem: T tables, E rows, D dim, batch B.
    T, E, D, B = 2, 64, 128, 4
    max_L = 5

    key = jax.random.PRNGKey(0)
    k_len, k_idx, k_w = jax.random.split(key, 3)

    # Per-bag lengths -> TBE offsets (length T*B + 1).
    lengths = jax.random.randint(k_len, (T * B,), 1, max_L + 1, dtype=jnp.int32)
    offsets = jnp.concatenate(
        [jnp.zeros((1,), jnp.int32), jnp.cumsum(lengths).astype(jnp.int32)])
    L = int(offsets[-1])          # concrete only to size the test data

    indices = jax.random.randint(k_idx, (L,), 0, E, dtype=jnp.int32)

    # Deterministic "init_embedding_weights_uniform" equivalent.
    weights = jax.random.uniform(
        k_w, (T, E, D), jnp.float32,
        minval=-EMB_WEIGHT_UNIFORM_INIT_BOUND,
        maxval=+EMB_WEIGHT_UNIFORM_INIT_BOUND)

    out = sparse_arch_forward(indices, offsets, weights)
    out = jax.block_until_ready(out)

    ref = _reference(indices, offsets, weights, B)
    np.testing.assert_allclose(np.asarray(out), ref, rtol=1e-5, atol=1e-7)

    print("KERNEL_OK")
</pallas_src>

<mosaic_0001>
module attributes {stable_mosaic.version = 11 : i64} {
  func.func @kernel(%arg0: i32, %arg1: i32, %arg2: memref<128x1xi32, #tpu.memory_space<vmem>>, %arg3: memref<1x16x1xi32, #tpu.memory_space<vmem>>, %arg4: memref<1x16x1xi32, #tpu.memory_space<vmem>>, %arg5: memref<2x64x128xf32, #tpu.memory_space<vmem>>, %arg6: memref<8x256xf32, #tpu.memory_space<vmem>>) attributes {dimension_semantics = [#tpu.dimension_semantics<parallel>, #tpu.dimension_semantics<arbitrary>], iteration_bounds = array<i64: 1, 1>, scalar_prefetch = 0 : i64, scratch_operands = 0 : i64, tpu.core_type = #tpu.core_type<tc>, window_params = [{pipeline_mode = #tpu.pipeline_mode<synchronous>, transform_indices = @transform_0, window_bounds = array<i64: 128, 1>}, {transform_indices = @transform_1, window_bounds = array<i64: 1, 16, 1>}, {transform_indices = @transform_2, window_bounds = array<i64: 1, 16, 1>}, {transform_indices = @transform_3, window_bounds = array<i64: 2, 64, 128>}, {transform_indices = @transform_4, window_bounds = array<i64: 8, 256>}]} {
    %c0_i32 = arith.constant 0 : i32
    %0 = arith.cmpi eq, %arg1, %c0_i32 : i32
    %1 = arith.extui %0 : i1 to i32
    %c0_i32_0 = arith.constant 0 : i32
    %2 = arith.cmpi ne, %1, %c0_i32_0 : i32
    scf.if %2 {
      %cst_26 = arith.constant 0.000000e+00 : f32
      %43 = vector.broadcast %cst_26 : f32 to vector<8x256xf32>
      %c0_27 = arith.constant 0 : index
      %c0_28 = arith.constant 0 : index
      %44 = vector.load %arg6[%c0_27, %c0_28] : memref<8x256xf32, #tpu.memory_space<vmem>>, vector<8x256xf32>
      tpu.vector_store %arg6[%c0_27, %c0_28], %43 {strides = array<i32>} : memref<8x256xf32, #tpu.memory_space<vmem>>, vector<8x256xf32>,
    } else {
    }
    %3 = tpu.iota {dimensions = array<i32: 1>} : vector<16x128xi32>
    %c0 = arith.constant 0 : index
    %c0_1 = arith.constant 0 : index
    %c0_2 = arith.constant 0 : index
    %4 = vector.load %arg3[%c0, %c0_1, %c0_2] : memref<1x16x1xi32, #tpu.memory_space<vmem>>, vector<1x16x1xi32>
    %5 = vector.shape_cast %4 : vector<1x16x1xi32> to vector<16x1xi32>
    %6 = vector.broadcast %5 : vector<16x1xi32> to vector<16x128xi32>
    %7 = arith.cmpi sge, %3, %6 : vector<16x128xi32>
    %c0_3 = arith.constant 0 : index
    %c0_4 = arith.constant 0 : index
    %c0_5 = arith.constant 0 : index
    %8 = vector.load %arg4[%c0_3, %c0_4, %c0_5] : memref<1x16x1xi32, #tpu.memory_space<vmem>>, vector<1x16x1xi32>
    %9 = vector.shape_cast %8 : vector<1x16x1xi32> to vector<16x1xi32>
    %10 = vector.broadcast %9 : vector<16x1xi32> to vector<16x128xi32>
    %11 = arith.cmpi slt, %3, %10 : vector<16x128xi32>
    %12 = arith.andi %7, %11 : vector<16x128xi1>
    %cst = arith.constant 1.000000e+00 : f32
    %cst_6 = arith.constant 0.000000e+00 : f32
    %13 = vector.broadcast %cst : f32 to vector<16x128xf32>
    %14 = vector.broadcast %cst_6 : f32 to vector<16x128xf32>
    %15 = arith.select %12, %13, %14 : vector<16x128xi1>, vector<16x128xf32>
    %16 = arith.truncf %15 : vector<16x128xf32> to vector<16x128xbf16>
    %17 = tpu.iota {dimensions = array<i32: 1>} : vector<128x64xi32>
    %c0_7 = arith.constant 0 : index
    %c0_8 = arith.constant 0 : index
    %18 = vector.load %arg2[%c0_7, %c0_8] : memref<128x1xi32, #tpu.memory_space<vmem>>, vector<128x1xi32>
    %c64_i32 = arith.constant 64 : i32
    %19 = arith.muli %arg1, %c64_i32 : i32
    %20 = vector.broadcast %19 : i32 to vector<128x1xi32>
    %21 = arith.subi %18, %20 : vector<128x1xi32>
    %22 = vector.broadcast %21 : vector<128x1xi32> to vector<128x64xi32>
    %23 = arith.cmpi eq, %22, %17 : vector<128x64xi32>
    %cst_9 = arith.constant 1.000000e+00 : f32
    %cst_10 = arith.constant 0.000000e+00 : f32
    %24 = vector.broadcast %cst_9 : f32 to vector<128x64xf32>
    %25 = vector.broadcast %cst_10 : f32 to vector<128x64xf32>
    %26 = arith.select %23, %24, %25 : vector<128x64xi1>, vector<128x64xf32>
    %27 = arith.truncf %26 : vector<128x64xf32> to vector<128x64xbf16>
    %cst_11 = arith.constant dense<0.000000e+00> : vector<16x64xf32>
    %28 = tpu.matmul %16, %27, %cst_11 {dimension_numbers = #tpu.dot_dimension_numbers<[1], [0], [0], [1], [0, 0, 1, 1], [], []>} : vector<16x128xbf16>, vector<128x64xbf16>, vector<16x64xf32> -> vector<16x64xf32>
    %c0_12 = arith.constant 0 : index
    %c0_13 = arith.constant 0 : index
    %29 = vector.load %arg6[%c0_12, %c0_13] : memref<8x256xf32, #tpu.memory_space<vmem>>, vector<8x128xf32>
    %30 = vector.extract_strided_slice %28 {offsets = [0, 0], sizes = [8, 64], strides = [1, 1]} : vector<16x64xf32> to vector<8x64xf32>
    %c0_14 = arith.constant 0 : index
    %c0_15 = arith.constant 0 : index
    %c0_16 = arith.constant 0 : index
    %31 = vector.load %arg5[%c0_14, %c0_15, %c0_16] : memref<2x64x128xf32, #tpu.memory_space<vmem>>, vector<1x64x128xf32>
    %32 = vector.shape_cast %31 : vector<1x64x128xf32> to vector<64x128xf32>
    %cst_17 = arith.constant dense<0.000000e+00> : vector<8x128xf32>
    %33 = tpu.matmul %30, %32, %cst_17 {dimension_numbers = #tpu.dot_dimension_numbers<[1], [0], [0], [1], [0, 0, 1, 1], [], []>} : vector<8x64xf32>, vector<64x128xf32>, vector<8x128xf32> -> vector<8x128xf32>
    %34 = arith.addf %29, %33 : vector<8x128xf32>
    %c0_18 = arith.constant 0 : index
    %c0_19 = arith.constant 0 : index
    %35 = vector.load %arg6[%c0_18, %c0_19] : memref<8x256xf32, #tpu.memory_space<vmem>>, vector<8x128xf32>
    tpu.vector_store %arg6[%c0_18, %c0_19], %34 {strides = array<i32>} : memref<8x256xf32, #tpu.memory_space<vmem>>, vector<8x128xf32>,
    %c0_20 = arith.constant 0 : index
    %c128 = arith.constant 128 : index
    %36 = vector.load %arg6[%c0_20, %c128] : memref<8x256xf32, #tpu.memory_space<vmem>>, vector<8x128xf32>
    %37 = vector.extract_strided_slice %28 {offsets = [8, 0], sizes = [8, 64], strides = [1, 1]} : vector<16x64xf32> to vector<8x64xf32>
    %c1 = arith.constant 1 : index
    %c0_21 = arith.constant 0 : index
    %c0_22 = arith.constant 0 : index
    %38 = vector.load %arg5[%c1, %c0_21, %c0_22] : memref<2x64x128xf32, #tpu.memory_space<vmem>>, vector<1x64x128xf32>
    %39 = vector.shape_cast %38 : vector<1x64x128xf32> to vector<64x128xf32>
    %cst_23 = arith.constant dense<0.000000e+00> : vector<8x128xf32>
    %40 = tpu.matmul %37, %39, %cst_23 {dimension_numbers = #tpu.dot_dimension_numbers<[1], [0], [0], [1], [0, 0, 1, 1], [], []>} : vector<8x64xf32>, vector<64x128xf32>, vector<8x128xf32> -> vector<8x128xf32>
    %41 = arith.addf %36, %40 : vector<8x128xf32>
    %c0_24 = arith.constant 0 : index
    %c128_25 = arith.constant 128 : index
    %42 = vector.load %arg6[%c0_24, %c128_25] : memref<8x256xf32, #tpu.memory_space<vmem>>, vector<8x128xf32>
    tpu.vector_store %arg6[%c0_24, %c128_25], %41 {strides = array<i32>} : memref<8x256xf32, #tpu.memory_space<vmem>>, vector<8x128xf32>,
    return
  }
  func.func @transform_0(%arg0: i32, %arg1: i32) -> (i32, i32) {
    %c0_i32 = arith.constant 0 : i32
    %c0_i32_0 = arith.constant 0 : i32
    %c0_i32_1 = arith.constant 0 : i32
    return %c0_i32, %c0_i32_0 : i32, i32
  }
  func.func @transform_1(%arg0: i32, %arg1: i32) -> (i32, i32, i32) {
    %c0_i32 = arith.constant 0 : i32
    %c0_i32_0 = arith.constant 0 : i32
    %c0_i32_1 = arith.constant 0 : i32
    return %arg0, %c0_i32, %c0_i32_0 : i32, i32, i32
  }
  func.func @transform_2(%arg0: i32, %arg1: i32) -> (i32, i32, i32) {
    %c0_i32 = arith.constant 0 : i32
    %c0_i32_0 = arith.constant 0 : i32
    %c0_i32_1 = arith.constant 0 : i32
    return %arg0, %c0_i32, %c0_i32_0 : i32, i32, i32
  }
  func.func @transform_3(%arg0: i32, %arg1: i32) -> (i32, i32, i32) {
    %c0_i32 = arith.constant 0 : i32
    %c0_i32_0 = arith.constant 0 : i32
    return %arg0, %arg1, %c0_i32 : i32, i32, i32
  }
  func.func @transform_4(%arg0: i32, %arg1: i32) -> (i32, i32) {
    %c0_i32 = arith.constant 0 : i32
    %c0_i32_0 = arith.constant 0 : i32
    return %c0_i32, %arg0 : i32, i32
  }
}

</mosaic_0001>

<llo_original>
// kernel: tpu_custom_call.1
$region0: #{tpu_custom_call.1}
  #allocation0 [shape = 'u32[]', space=smem, size = 0x4, offset = 0x4, fixed_abs, tag = 'smem constant byte address 0x4 - core index']
  #allocation1 [shape = 'u32[144,128]{1,0:T(1,128)}', space=vmem, size = 0x12000, scoped, tag = 'internal scratch']
  %s0 = inlined_call_operand.vmem [shape: s32[128,1], index: 0, kind: input, shape index: {}]
  %s1 = inlined_call_operand.vmem [shape: s32[1,16,1], index: 1, kind: input, shape index: {}]
  %s2 = inlined_call_operand.vmem [shape: s32[1,16,1], index: 2, kind: input, shape index: {}]
  %s3 = inlined_call_operand.vmem [shape: f32[2,64,128], index: 3, kind: input, shape index: {}]
  %s4 = inlined_call_operand.hbm [shape: f32[8,256], index: 4, kind: output, shape index: {}]
  %s5 = sld [smem:[#allocation0]]
  $region30: #{tpu_custom_call.1} parent=0
    _
  %s7 = ssub.s32 1, %s5
  %s8 = scalar_select 0, %s7, %s5
  $region1: #{tpu_custom_call.1} parent=0
    #allocation2 [shape = 'u8[8192]{0}', space=vmem, size = 0x2000, scoped, tag = 'output window, operand 0, single buffered']
    #allocation3 [shape = 's32[1]{0}', space=sflag, size = 0x4, scoped, tag = 'scoped memory for tpu_custom_call.1']
    %9 = vsyncpa [#allocation3], 0
    // Predicated region
    $region2: #{tpu_custom_call.1} parent=1 // pred_check
      _
    $region3: #{tpu_custom_call.1} parent=1 // pred_check_branch
      %11 = sbr.rel (0) target = $region5
    $region4: #{tpu_custom_call.1} parent=1 // pred_region
      _
    $region5: #{tpu_custom_call.1} parent=1 // pred_fallthru
      _
    // Predicated region
    $region6: #{tpu_custom_call.1} parent=1 // pred_check
      _
    $region7: #{tpu_custom_call.1} parent=1 // pred_check_branch
      %13 = sbr.rel (0) target = $region9
    $region8: #{tpu_custom_call.1} parent=1 // pred_region
      _
    $region9: #{tpu_custom_call.1} parent=1 // pred_fallthru
      _
    // Predicated region
    $region10: #{tpu_custom_call.1} parent=1 // pred_check
      _
    $region11: #{tpu_custom_call.1} parent=1 // pred_check_branch
      %15 = sbr.rel (0) target = $region13
    $region12: #{tpu_custom_call.1} parent=1 // pred_region
      _
    $region13: #{tpu_custom_call.1} parent=1 // pred_fallthru
      _
    // Predicated region
    $region14: #{tpu_custom_call.1} parent=1 // pred_check
      _
    $region15: #{tpu_custom_call.1} parent=1 // pred_check_branch
      %17 = sbr.rel (0) target = $region17
    $region16: #{tpu_custom_call.1} parent=1 // pred_region
      _
    $region17: #{tpu_custom_call.1} parent=1 // pred_fallthru
      _
    %p19 = scmp.eq.s32.totalorder 0, 0
    // Predicated region
    $region18: #{tpu_custom_call.1} parent=1 // pred_check
      %p20 = pneg %p19
    $region19: #{tpu_custom_call.1} parent=1 // pred_check_branch
      %22 = sbr.rel (%p20) target = $region21
    $region20: #{tpu_custom_call.1} parent=1 // pred_region
      %23 = vst [vmem:[#allocation2] sm:$0xff] 0.0
      %24 = vst [vmem:[#allocation2 + $0x8] sm:$0xff] 0.0
    $region21: #{tpu_custom_call.1} parent=1 // pred_fallthru
      _
    %v25 = vlaneseq
    %v26 = vand.u32 %v25, 127
    %v27 = vld [vmem:[%s1] sm:$0xff]
    %v28 = vld [vmem:[%s1 + $0x8] sm:$0xff]
    %29 = vset.pattern.permute.xlu0 0
    %30 = vperm.xlu0 %29, %v27
    %v31 = vpop.permute.xlu0 %30
    %32 = vset.pattern.permute.xlu0 0
    %33 = vperm.xlu0 %32, %v28
    %v34 = vpop.permute.xlu0 %33
    %vm35 = vcmp.ge.s32.totalorder %v26, %v31
    %vm36 = vcmp.ge.s32.totalorder %v26, %v34
    %v37 = vld [vmem:[%s2] sm:$0xff]
    %v38 = vld [vmem:[%s2 + $0x8] sm:$0xff]
    %39 = vset.pattern.permute.xlu0 0
    %40 = vperm.xlu0 %39, %v37
    %v41 = vpop.permute.xlu0 %40
    %42 = vset.pattern.permute.xlu0 0
    %43 = vperm.xlu0 %42, %v38
    %v44 = vpop.permute.xlu0 %43
    %vm45 = vcmp.lt.s32.totalorder %v26, %v41
    %vm46 = vcmp.lt.s32.totalorder %v26, %v44
    %vm47 = vmand %vm35, %vm45
    %vm48 = vmand %vm36, %vm46
    %v49 = vsel %vm47, 1.0, 0.0
    %v50 = vsel %vm48, 1.0, 0.0
    %v51 = vpack.c.bf16 %v50, %v49
    %v52 = vld [vmem:[%s0] sm:$0xff]
    %v53 = vld [vmem:[%s0 + $0x8] sm:$0xff]
    %v54 = vld [vmem:[%s0 + $0x10] sm:$0xff]
    %v55 = vld [vmem:[%s0 + $0x18] sm:$0xff]
    %v56 = vld [vmem:[%s0 + $0x20] sm:$0xff]
    %v57 = vld [vmem:[%s0 + $0x28] sm:$0xff]
    %v58 = vld [vmem:[%s0 + $0x30] sm:$0xff]
    %v59 = vld [vmem:[%s0 + $0x38] sm:$0xff]
    %v60 = vld [vmem:[%s0 + $0x40] sm:$0xff]
    %v61 = vld [vmem:[%s0 + $0x48] sm:$0xff]
    %v62 = vld [vmem:[%s0 + $0x50] sm:$0xff]
    %v63 = vld [vmem:[%s0 + $0x58] sm:$0xff]
    %v64 = vld [vmem:[%s0 + $0x60] sm:$0xff]
    %v65 = vld [vmem:[%s0 + $0x68] sm:$0xff]
    %v66 = vld [vmem:[%s0 + $0x70] sm:$0xff]
    %v67 = vld [vmem:[%s0 + $0x78] sm:$0xff]
    %s68 = smul.u32 0, 64
    %v69 = vstv %s68
    %v70 = vsub.s32 %v52, %v69
    %v71 = vsub.s32 %v53, %v69
    %v72 = vsub.s32 %v54, %v69
    %v73 = vsub.s32 %v55, %v69
    %v74 = vsub.s32 %v56, %v69
    %v75 = vsub.s32 %v57, %v69
    %v76 = vsub.s32 %v58, %v69
    %v77 = vsub.s32 %v59, %v69
    %v78 = vsub.s32 %v60, %v69
    %v79 = vsub.s32 %v61, %v69
    %v80 = vsub.s32 %v62, %v69
    %v81 = vsub.s32 %v63, %v69
    %v82 = vsub.s32 %v64, %v69
    %v83 = vsub.s32 %v65, %v69
    %v84 = vsub.s32 %v66, %v69
    %v85 = vsub.s32 %v67, %v69
    %86 = vset.pattern.permute.xlu0 0
    %87 = vperm.xlu0 %86, %v70
    %v88 = vpop.permute.xlu0 %87
    %89 = vset.pattern.permute.xlu0 0
    %90 = vperm.xlu0 %89, %v71
    %v91 = vpop.permute.xlu0 %90
    %92 = vset.pattern.permute.xlu0 0
    %93 = vperm.xlu0 %92, %v72
    %v94 = vpop.permute.xlu0 %93
    %95 = vset.pattern.permute.xlu0 0
    %96 = vperm.xlu0 %95, %v73
    %v97 = vpop.permute.xlu0 %96
    %98 = vset.pattern.permute.xlu0 0
    %99 = vperm.xlu0 %98, %v74
    %v100 = vpop.permute.xlu0 %99
    %101 = vset.pattern.permute.xlu0 0
    %102 = vperm.xlu0 %101, %v75
    %v103 = vpop.permute.xlu0 %102
    %104 = vset.pattern.permute.xlu0 0
    %105 = vperm.xlu0 %104, %v76
    %v106 = vpop.permute.xlu0 %105
    %107 = vset.pattern.permute.xlu0 0
    %108 = vperm.xlu0 %107, %v77
    %v109 = vpop.permute.xlu0 %108
    %110 = vset.pattern.permute.xlu0 0
    %111 = vperm.xlu0 %110, %v78
    %v112 = vpop.permute.xlu0 %111
    %113 = vset.pattern.permute.xlu0 0
    %114 = vperm.xlu0 %113, %v79
    %v115 = vpop.permute.xlu0 %114
    %116 = vset.pattern.permute.xlu0 0
    %117 = vperm.xlu0 %116, %v80
    %v118 = vpop.permute.xlu0 %117
    %119 = vset.pattern.permute.xlu0 0
    %120 = vperm.xlu0 %119, %v81
    %v121 = vpop.permute.xlu0 %120
    %122 = vset.pattern.permute.xlu0 0
    %123 = vperm.xlu0 %122, %v82
    %v124 = vpop.permute.xlu0 %123
    %125 = vset.pattern.permute.xlu0 0
    %126 = vperm.xlu0 %125, %v83
    %v127 = vpop.permute.xlu0 %126
    %128 = vset.pattern.permute.xlu0 0
    %129 = vperm.xlu0 %128, %v84
    %v130 = vpop.permute.xlu0 %129
    %131 = vset.pattern.permute.xlu0 0
    %132 = vperm.xlu0 %131, %v85
    %v133 = vpop.permute.xlu0 %132
    %vm134 = vcmp.eq.s32.totalorder %v88, %v26
    %vm135 = vcmp.eq.s32.totalorder %v91, %v26
    %vm136 = vcmp.eq.s32.totalorder %v94, %v26
    %vm137 = vcmp.eq.s32.totalorder %v97, %v26
    %vm138 = vcmp.eq.s32.totalorder %v100, %v26
    %vm139 = vcmp.eq.s32.totalorder %v103, %v26
    %vm140 = vcmp.eq.s32.totalorder %v106, %v26
    %vm141 = vcmp.eq.s32.totalorder %v109, %v26
    %vm142 = vcmp.eq.s32.totalorder %v112, %v26
    %vm143 = vcmp.eq.s32.totalorder %v115, %v26
    %vm144 = vcmp.eq.s32.totalorder %v118, %v26
    %vm145 = vcmp.eq.s32.totalorder %v121, %v26
    %vm146 = vcmp.eq.s32.totalorder %v124, %v26
    %vm147 = vcmp.eq.s32.totalorder %v127, %v26
    %vm148 = vcmp.eq.s32.totalorder %v130, %v26
    %vm149 = vcmp.eq.s32.totalorder %v133, %v26
    %v150 = vsel %vm134, 1.0, 0.0
    %v151 = vsel %vm135, 1.0, 0.0
    %v152 = vsel %vm136, 1.0, 0.0
    %v153 = vsel %vm137, 1.0, 0.0
    %v154 = vsel %vm138, 1.0, 0.0
    %v155 = vsel %vm139, 1.0, 0.0
    %v156 = vsel %vm140, 1.0, 0.0
    %v157 = vsel %vm141, 1.0, 0.0
    %v158 = vsel %vm142, 1.0, 0.0
    %v159 = vsel %vm143, 1.0, 0.0
    %v160 = vsel %vm144, 1.0, 0.0
    %v161 = vsel %vm145, 1.0, 0.0
    %v162 = vsel %vm146, 1.0, 0.0
    %v163 = vsel %vm147, 1.0, 0.0
    %v164 = vsel %vm148, 1.0, 0.0
    %v165 = vsel %vm149, 1.0, 0.0
    %v166 = vpack.c.bf16 %v151, %v150
    %v167 = vpack.c.bf16 %v153, %v152
    %v168 = vpack.c.bf16 %v155, %v154
    %v169 = vpack.c.bf16 %v157, %v156
    %v170 = vpack.c.bf16 %v159, %v158
    %v171 = vpack.c.bf16 %v161, %v160
    %v172 = vpack.c.bf16 %v163, %v162
    %v173 = vpack.c.bf16 %v165, %v164
    %174 = vmatprep.subr.bf16.mxu0 0
    %175 = vmatpush1.bf16.msra.mxu0 %v166
    %176 = vmatprep.subr.bf16.mxu0 0
    %177 = vmatpush1.bf16.msra.mxu0 %v167
    %178 = vmatprep.subr.bf16.mxu0 0
    %179 = vmatpush1.bf16.msra.mxu0 %v168
    %180 = vmatprep.subr.bf16.mxu0 0
    %181 = vmatpush1.bf16.msra.mxu0 %v169
    %182 = vmatprep.subr.bf16.mxu0 0
    %183 = vmatpush1.bf16.msra.mxu0 %v170
    %184 = vmatprep.subr.bf16.mxu0 0
    %185 = vmatpush1.bf16.msra.mxu0 %v171
    %186 = vmatprep.subr.bf16.mxu0 0
    %187 = vmatpush1.bf16.msra.mxu0 %v172
    %188 = vmatprep.subr.bf16.mxu0 0
    %189 = vmatpush1.bf16.msra.mxu0 %v173
    %190 = vmatprep.subr.bf16.mxu0 0
    %191 = vmatpush1.bf16.msra.mxu0 0
    %192 = vmatprep.subr.bf16.mxu0 0
    %193 = vmatpush1.bf16.msra.mxu0 0
    %194 = vmatprep.subr.bf16.mxu0 0
    %195 = vmatpush1.bf16.msra.mxu0 0
    %196 = vmatprep.subr.bf16.mxu0 0
    %197 = vmatpush1.bf16.msra.mxu0 0
    %198 = vmatprep.subr.bf16.mxu0 0
    %199 = vmatpush1.bf16.msra.mxu0 0
    %200 = vmatprep.subr.bf16.mxu0 0
    %201 = vmatpush1.bf16.msra.mxu0 0
    %202 = vmatprep.subr.bf16.mxu0 0
    %203 = vmatpush1.bf16.msra.mxu0 0
    %204 = vmatprep.subr.bf16.mxu0 0
    %205 = vmatpush1.bf16.msra.mxu0 0
    %206 = vmatprep.mubr.bf16.mxu0 0
    %207 = vmatmul.mubr.bf16.gmra.mrb[0].mxu0 %v51
    %v208 = vpop.f32.mrb[0].mxu0
    %v209 = vadd.f32 0.0, %v208
    %v210 = vpop.f32.mrb[0].mxu0
    %v211 = vpop.f32.mrb[0].mxu0
    %v212 = vadd.f32 0.0, %v211
    %v213 = vpop.f32.mrb[0].mxu0
    %214 = vdwg.mxu0
    %v215 = vld [vmem:[#allocation2] sm:$0xff]
    %v216 = vld [vmem:[%s3] sm:$0xff]
    %v217 = vld [vmem:[%s3 + $0x8] sm:$0xff]
    %v218 = vld [vmem:[%s3 + $0x10] sm:$0xff]
    %v219 = vld [vmem:[%s3 + $0x18] sm:$0xff]
    %v220 = vld [vmem:[%s3 + $0x20] sm:$0xff]
    %v221 = vld [vmem:[%s3 + $0x28] sm:$0xff]
    %v222 = vld [vmem:[%s3 + $0x30] sm:$0xff]
    %v223 = vld [vmem:[%s3 + $0x38] sm:$0xff]
    %vm224 = vcmask 523264
    %v226 = vsel %vm224, %v209, 0
    %228 = vmatprep.subr.mxu0 0.0
    %229 = vmatpush1.msra.mxu0 %v216
    %230 = vmatprep.subr.mxu0 0.0
    %231 = vmatpush1.msra.mxu0 %v217
    %232 = vmatprep.subr.mxu0 0.0
    %233 = vmatpush1.msra.mxu0 %v218
    %234 = vmatprep.subr.mxu0 0.0
    %235 = vmatpush1.msra.mxu0 %v219
    %236 = vmatprep.subr.mxu0 0.0
    %237 = vmatpush1.msra.mxu0 %v220
    %238 = vmatprep.subr.mxu0 0.0
    %239 = vmatpush1.msra.mxu0 %v221
    %240 = vmatprep.subr.mxu0 0.0
    %241 = vmatpush1.msra.mxu0 %v222
    %242 = vmatprep.subr.mxu0 0.0
    %243 = vmatpush1.msra.mxu0 %v223
    %244 = vmatprep.subr.mxu0 0.0
    %245 = vmatpush1.msra.mxu0 0.0
    %246 = vmatprep.subr.mxu0 0.0
    %247 = vmatpush1.msra.mxu0 0.0
    %248 = vmatprep.subr.mxu0 0.0
    %249 = vmatpush1.msra.mxu0 0.0
    %250 = vmatprep.subr.mxu0 0.0
    %251 = vmatpush1.msra.mxu0 0.0
    %252 = vmatprep.subr.mxu0 0.0
    %253 = vmatpush1.msra.mxu0 0.0
    %254 = vmatprep.subr.mxu0 0.0
    %255 = vmatpush1.msra.mxu0 0.0
    %256 = vmatprep.subr.mxu0 0.0
    %257 = vmatpush1.msra.mxu0 0.0
    %258 = vmatprep.subr.mxu0 0.0
    %259 = vmatpush1.msra.mxu0 0.0
    %260 = vmatprep.subr.mxu0 0.0
    %261 = vmatpush1.msra.mxu0 0.0
    %262 = vmatprep.subr.mxu0 0.0
    %263 = vmatpush1.msra.mxu0 0.0
    %264 = vmatprep.subr.mxu0 0.0
    %265 = vmatpush1.msra.mxu0 0.0
    %266 = vmatprep.subr.mxu0 0.0
    %267 = vmatpush1.msra.mxu0 0.0
    %268 = vmatprep.subr.mxu0 0.0
    %269 = vmatpush1.msra.mxu0 0.0
    %270 = vmatprep.subr.mxu0 0.0
    %271 = vmatpush1.msra.mxu0 0.0
    %272 = vmatprep.subr.mxu0 0.0
    %273 = vmatpush1.msra.mxu0 0.0
    %274 = vmatprep.subr.mxu0 0.0
    %275 = vmatpush1.msra.mxu0 0.0
    %276 = vmatprep.subr.mxu0 0.0
    %277 = vmatpush1.msra.mxu0 0.0
    %278 = vmatprep.subr.mxu0 0.0
    %279 = vmatpush1.msra.mxu0 0.0
    %280 = vmatprep.subr.mxu0 0.0
    %281 = vmatpush1.msra.mxu0 0.0
    %282 = vmatprep.subr.mxu0 0.0
    %283 = vmatpush1.msra.mxu0 0.0
    %284 = vmatprep.subr.mxu0 0.0
    %285 = vmatpush1.msra.mxu0 0.0
    %286 = vmatprep.subr.mxu0 0.0
    %287 = vmatpush1.msra.mxu0 0.0
    %288 = vmatprep.subr.mxu0 0.0
    %289 = vmatpush1.msra.mxu0 0.0
    %290 = vmatprep.subr.mxu0 0.0
    %291 = vmatpush1.msra.mxu0 0.0
    %292 = vmatprep.mubr.f32.mxu0 0.0
    %293 = vmatmul.mubr.f32.gmra.mrb[0].mxu0 %v226
    %v294 = vpop.f32.mrb[0].mxu0
    %v295 = vadd.f32 0.0, %v294
    %v296 = vpop.f32.mrb[0].mxu0
    %297 = vdwg.mxu0
    %v298 = vadd.f32 %v215, %v295
    %299 = vst [vmem:[#allocation2] sm:$0xff] %v298
    %v300 = vld [vmem:[#allocation2 + $0x8] sm:$0xff]
    %s301 = scalar_lea.vmem %s3, 64
    %v302 = vld [vmem:[%s301] sm:$0xff]
    %v303 = vld [vmem:[%s301 + $0x8] sm:$0xff]
    %v304 = vld [vmem:[%s301 + $0x10] sm:$0xff]
    %v305 = vld [vmem:[%s301 + $0x18] sm:$0xff]
    %v306 = vld [vmem:[%s301 + $0x20] sm:$0xff]
    %v307 = vld [vmem:[%s301 + $0x28] sm:$0xff]
    %v308 = vld [vmem:[%s301 + $0x30] sm:$0xff]
    %v309 = vld [vmem:[%s301 + $0x38] sm:$0xff]
    %v311 = vsel %vm224, %v212, 0
    %313 = vmatprep.subr.mxu0 0.0
    %314 = vmatpush1.msra.mxu0 %v302
    %315 = vmatprep.subr.mxu0 0.0
    %316 = vmatpush1.msra.mxu0 %v303
    %317 = vmatprep.subr.mxu0 0.0
    %318 = vmatpush1.msra.mxu0 %v304
    %319 = vmatprep.subr.mxu0 0.0
    %320 = vmatpush1.msra.mxu0 %v305
    %321 = vmatprep.subr.mxu0 0.0
    %322 = vmatpush1.msra.mxu0 %v306
    %323 = vmatprep.subr.mxu0 0.0
    %324 = vmatpush1.msra.mxu0 %v307
    %325 = vmatprep.subr.mxu0 0.0
    %326 = vmatpush1.msra.mxu0 %v308
    %327 = vmatprep.subr.mxu0 0.0
    %328 = vmatpush1.msra.mxu0 %v309
    %329 = vmatprep.subr.mxu0 0.0
    %330 = vmatpush1.msra.mxu0 0.0
    %331 = vmatprep.subr.mxu0 0.0
    %332 = vmatpush1.msra.mxu0 0.0
    %333 = vmatprep.subr.mxu0 0.0
    %334 = vmatpush1.msra.mxu0 0.0
    %335 = vmatprep.subr.mxu0 0.0
    %336 = vmatpush1.msra.mxu0 0.0
    %337 = vmatprep.subr.mxu0 0.0
    %338 = vmatpush1.msra.mxu0 0.0
    %339 = vmatprep.subr.mxu0 0.0
    %340 = vmatpush1.msra.mxu0 0.0
    %341 = vmatprep.subr.mxu0 0.0
    %342 = vmatpush1.msra.mxu0 0.0
    %343 = vmatprep.subr.mxu0 0.0
    %344 = vmatpush1.msra.mxu0 0.0
    %345 = vmatprep.subr.mxu0 0.0
    %346 = vmatpush1.msra.mxu0 0.0
    %347 = vmatprep.subr.mxu0 0.0
    %348 = vmatpush1.msra.mxu0 0.0
    %349 = vmatprep.subr.mxu0 0.0
    %350 = vmatpush1.msra.mxu0 0.0
    %351 = vmatprep.subr.mxu0 0.0
    %352 = vmatpush1.msra.mxu0 0.0
    %353 = vmatprep.subr.mxu0 0.0
    %354 = vmatpush1.msra.mxu0 0.0
    %355 = vmatprep.subr.mxu0 0.0
    %356 = vmatpush1.msra.mxu0 0.0
    %357 = vmatprep.subr.mxu0 0.0
    %358 = vmatpush1.msra.mxu0 0.0
    %359 = vmatprep.subr.mxu0 0.0
    %360 = vmatpush1.msra.mxu0 0.0
    %361 = vmatprep.subr.mxu0 0.0
    %362 = vmatpush1.msra.mxu0 0.0
    %363 = vmatprep.subr.mxu0 0.0
    %364 = vmatpush1.msra.mxu0 0.0
    %365 = vmatprep.subr.mxu0 0.0
    %366 = vmatpush1.msra.mxu0 0.0
    %367 = vmatprep.subr.mxu0 0.0
    %368 = vmatpush1.msra.mxu0 0.0
    %369 = vmatprep.subr.mxu0 0.0
    %370 = vmatpush1.msra.mxu0 0.0
    %371 = vmatprep.subr.mxu0 0.0
    %372 = vmatpush1.msra.mxu0 0.0
    %373 = vmatprep.subr.mxu0 0.0
    %374 = vmatpush1.msra.mxu0 0.0
    %375 = vmatprep.subr.mxu0 0.0
    %376 = vmatpush1.msra.mxu0 0.0
    %377 = vmatprep.mubr.f32.mxu0 0.0
    %378 = vmatmul.mubr.f32.gmra.mrb[0].mxu0 %v311
    %v379 = vpop.f32.mrb[0].mxu0
    %v380 = vadd.f32 0.0, %v379
    %v381 = vpop.f32.mrb[0].mxu0
    %382 = vdwg.mxu0
    %v383 = vadd.f32 %v300, %v380
    %384 = vst [vmem:[#allocation2 + $0x8] sm:$0xff] %v383
    // Predicated region
    $region22: #{tpu_custom_call.1} parent=1 // pred_check
      _
    $region23: #{tpu_custom_call.1} parent=1 // pred_check_branch
      %386 = sbr.rel (0) target = $region25
    $region24: #{tpu_custom_call.1} parent=1 // pred_region
      %s388 = ssub.s32 256, 256
      %389 = vsyncadd [#allocation3], %s388
      %s391 = sshll.u32 [#allocation2], 4
      %s392 = int_to_ptr.vmem [resolvable:$true] %s391
      %394 = dma.vmem_to_hbm [thread:$0]  %s392, 256, %s4, [#allocation3]
    $region25: #{tpu_custom_call.1} parent=1 // pred_fallthru
      _
    // Predicated region
    $region26: #{tpu_custom_call.1} parent=1 // pred_check
      _
    $region27: #{tpu_custom_call.1} parent=1 // pred_check_branch
      %396 = sbr.rel (0) target = $region29
    $region28: #{tpu_custom_call.1} parent=1 // pred_region
      %397 = dma.done [#allocation3], 256
    $region29: #{tpu_custom_call.1} parent=1 // pred_fallthru
      _
    %398 = vsyncpa [#allocation3], 1

</llo_original>
